<compile_context>
chip_gen: v5e
topology: v5e:2x2
jax: 0.10.0
libtpu: 0.0.40
codegen_flags: <defaults>
</compile_context>

<pallas_src>
import math

import jax
import jax.numpy as jnp
from jax import lax
from jax.experimental import pallas as pl
from jax.experimental.pallas import tpu as pltpu


def _irreps_dim(lmax: int) -> int:
    return sum((2 * l + 1) ** 2 for l in range(lmax + 1))


def _round_up(x: int, m: int) -> int:
    return -(-x // m) * m


# --------------------------------------------------------------------------
# Pallas kernel: per-l tiled matmul with K accumulator (the activation hot path)
#   grid = (l, row_tile, col_tile, k_tile);  k is the reduction axis (last).
# --------------------------------------------------------------------------
def _so3_linear_kernel(x_ref, w_ref, o_ref, acc_ref):
    @pl.when(pl.program_id(3) == 0)
    def _init():
        acc_ref[...] = jnp.zeros_like(acc_ref)

    acc_ref[...] += jnp.dot(
        x_ref[0], w_ref[0], preferred_element_type=jnp.float32
    )

    @pl.when(pl.program_id(3) == pl.num_programs(3) - 1)
    def _finalize():
        o_ref[0] = acc_ref[...].astype(o_ref.dtype)


# --------------------------------------------------------------------------
# Wrapper-side parameter restructuring (weights only; no activation data).
#   Builds W_stk[l, x*dm+u, y*dm+v] = pw_l * psi_l[x, y, u, v], zero-padded.
# --------------------------------------------------------------------------
def _build_weight_stack(w, D, lmax, Kp, Np, dtype):
    f_in, f_out, N = w.shape
    dm = 2 * lmax + 1
    # psi left to XLA per the review ("folded into the fused kernel or left to XLA").
    psi = jnp.einsum(
        "ni,xyn->xyi", D, w, precision=lax.Precision.HIGHEST
    ) / math.sqrt(N)                                             # [f_in, f_out, I]
    blocks = []
    off = 0
    for l in range(lmax + 1):
        d = 2 * l + 1
        pw = 1.0 / math.sqrt(d * f_in)                            # e3nn path norm
        blk = psi[:, :, off:off + d * d].reshape(f_in, f_out, d, d)   # x,y,u,v
        blk = jnp.transpose(blk, (0, 2, 1, 3)) * pw                   # x,u,y,v
        blk = jnp.pad(blk, ((0, 0), (0, dm - d), (0, 0), (0, dm - d)))
        blocks.append(blk.reshape(f_in * dm, f_out * dm))
        off += d * d
    Wstk = jnp.stack(blocks, axis=0)                              # [L, f_in*dm, f_out*dm]
    Wstk = jnp.pad(
        Wstk, ((0, 0), (0, Kp - f_in * dm), (0, Np - f_out * dm))
    )
    return Wstk.astype(dtype)


# Activation layout plumbing (lane-dense kron-free layout for the kernel).
#   X_stk[l, b*dm+j, x*dm+u] = x_l[b, x, u, j], zero-padded.
def _build_x_stack(x, lmax, Mp, Kp, dtype):
    B, f_in, _ = x.shape
    dm = 2 * lmax + 1
    blocks = []
    off = 0
    for l in range(lmax + 1):
        d = 2 * l + 1
        xb = x[:, :, off:off + d * d].reshape(B, f_in, d, d)      # b,x,u,j
        xb = jnp.transpose(xb, (0, 3, 1, 2))                      # b,j,x,u
        xb = jnp.pad(xb, ((0, 0), (0, dm - d), (0, 0), (0, dm - d)))
        blocks.append(xb.reshape(B * dm, f_in * dm))
        off += d * d
    Xstk = jnp.stack(blocks, axis=0)                              # [L, B*dm, f_in*dm]
    Xstk = jnp.pad(Xstk, ((0, 0), (0, Mp - B * dm), (0, Kp - f_in * dm)))
    return Xstk.astype(dtype)


#   out[b, y, off_l + v*d + j] = out_stk[l, b*dm+j, y*dm+v]
def _unstack_out(out_stk, lmax, B, f_out):
    dm = 2 * lmax + 1
    outs = []
    for l in range(lmax + 1):
        d = 2 * l + 1
        blk = out_stk[l, :B * dm, :f_out * dm].reshape(B, dm, f_out, dm)
        blk = blk[:, :d, :, :d]                                   # b,j,y,v
        blk = jnp.transpose(blk, (0, 2, 3, 1)).reshape(B, f_out, d * d)  # b,y,(v,j)
        outs.append(blk)
    return jnp.concatenate(outs, axis=-1)


# --------------------------------------------------------------------------
# Public forward
# --------------------------------------------------------------------------
def so3_convolution(x, w, D, lmax, *, compute_dtype=jnp.float32):
    B, f_in, I = x.shape
    f_out = w.shape[1]
    L = lmax + 1
    dm = 2 * lmax + 1

    # Tile sizes: rows multiple of 8, K/N lane-dense multiples of 128, capped so
    # double-buffered blocks stay well inside v7x's 64 MiB VMEM (and v5e/v6e).
    TM = min(256, _round_up(B * dm, 8))
    TK = min(1024, _round_up(f_in * dm, 128))
    TN = min(1024, _round_up(f_out * dm, 128))
    Mp = _round_up(B * dm, TM)
    Kp = _round_up(f_in * dm, TK)
    Np = _round_up(f_out * dm, TN)

    Wstk = _build_weight_stack(w, D, lmax, Kp, Np, compute_dtype)   # [L, Kp, Np]
    Xstk = _build_x_stack(x, lmax, Mp, Kp, compute_dtype)           # [L, Mp, Kp]

    grid = (L, Mp // TM, Np // TN, Kp // TK)

    out_stk = pl.pallas_call(
        _so3_linear_kernel,
        out_shape=jax.ShapeDtypeStruct((L, Mp, Np), jnp.float32),
        grid_spec=pltpu.PrefetchScalarGridSpec(
            num_scalar_prefetch=0,
            grid=grid,
            in_specs=[
                pl.BlockSpec((1, TM, TK), lambda l, i, j, k: (l, i, k)),
                pl.BlockSpec((1, TK, TN), lambda l, i, j, k: (l, k, j)),
            ],
            out_specs=pl.BlockSpec((1, TM, TN), lambda l, i, j, k: (l, i, j)),
            scratch_shapes=[pltpu.VMEM((TM, TN), jnp.float32)],
        ),
        compiler_params=pltpu.CompilerParams(
            dimension_semantics=("parallel", "parallel", "parallel", "arbitrary")
        ),
    )(Xstk, Wstk)

    return _unstack_out(out_stk, lmax, B, f_out)


# --------------------------------------------------------------------------
# Pure-JAX reference (mirrors e3nn o3.Linear semantics)
# --------------------------------------------------------------------------
def so3_convolution_ref(x, w, D, lmax):
    N, _ = D.shape
    f_in, f_out, _ = w.shape
    psi = jnp.einsum(
        "ni,xyn->xyi", D, w, precision=lax.Precision.HIGHEST
    ) / math.sqrt(N)
    outs = []
    off = 0
    for l in range(lmax + 1):
        d = 2 * l + 1
        W = psi[:, :, off:off + d * d].reshape(f_in, f_out, d, d)
        X = x[:, :, off:off + d * d].reshape(-1, f_in, d, d)
        pw = 1.0 / math.sqrt(d * f_in)
        Y = pw * jnp.einsum(
            "xyuv,bxuj->byvj", W, X, precision=lax.Precision.HIGHEST
        )
        outs.append(Y.reshape(-1, f_out, d * d))
        off += d * d
    return jnp.concatenate(outs, axis=-1)


if __name__ == "__main__":
    def run_case(lmax, f_in, f_out, B, n_grid, seed=0):
        I = _irreps_dim(lmax)
        key = jax.random.PRNGKey(seed)
        kx, kw, kd = jax.random.split(key, 3)
        x = jax.random.normal(kx, (B, f_in, I), dtype=jnp.float32)
        w = jax.random.normal(kw, (f_in, f_out, n_grid), dtype=jnp.float32)
        # TODO(synk): D should be flat_wigner(lmax, *kernel_grid) (stacked, scaled
        # Wigner-D matrices); synthesized here as a deterministic random buffer.
        D = jax.random.normal(kd, (n_grid, I), dtype=jnp.float32)

        out = jax.block_until_ready(so3_convolution(x, w, D, lmax))
        ref = jax.block_until_ready(so3_convolution_ref(x, w, D, lmax))
        assert out.shape == (B, f_out, I), out.shape
        err = float(jnp.max(jnp.abs(out - ref)))
        assert jnp.allclose(out, ref, rtol=1e-4, atol=1e-4), err

    # Toy size from the module spec (lmax=2 -> I=35, 24 kernel-grid points).
    run_case(lmax=2, f_in=4, f_out=4, B=2, n_grid=24)
    # Larger batch to exercise the multi-tile row axis of the grid.
    run_case(lmax=2, f_in=8, f_out=8, B=64, n_grid=12)
    print("KERNEL_OK")
</pallas_src>

<mosaic_0001>
module attributes {stable_mosaic.version = 11 : i64} {
  func.func @_so3_linear_kernel(%arg0: i32, %arg1: i32, %arg2: i32, %arg3: i32, %arg4: memref<1x16x128xf32, #tpu.memory_space<vmem>>, %arg5: memref<1x128x128xf32, #tpu.memory_space<vmem>>, %arg6: memref<1x16x128xf32, #tpu.memory_space<vmem>>, %arg7: memref<16x128xf32, #tpu.memory_space<vmem>>) attributes {dimension_semantics = [#tpu.dimension_semantics<parallel>, #tpu.dimension_semantics<parallel>, #tpu.dimension_semantics<parallel>, #tpu.dimension_semantics<arbitrary>], iteration_bounds = array<i64: 3, 1, 1, 1>, scalar_prefetch = 0 : i64, scratch_operands = 1 : i64, tpu.core_type = #tpu.core_type<tc>, window_params = [{transform_indices = @transform_0, window_bounds = array<i64: 1, 16, 128>}, {transform_indices = @transform_1, window_bounds = array<i64: 1, 128, 128>}, {transform_indices = @transform_2, window_bounds = array<i64: 1, 16, 128>}]} {
    %c0_i32 = arith.constant 0 : i32
    %0 = arith.cmpi eq, %arg3, %c0_i32 : i32
    %1 = arith.extui %0 : i1 to i32
    %c0_i32_0 = arith.constant 0 : i32
    %2 = arith.cmpi ne, %1, %c0_i32_0 : i32
    scf.if %2 {
      %cst_12 = arith.constant 0.000000e+00 : f32
      %14 = vector.broadcast %cst_12 : f32 to vector<16x128xf32>
      %c0_13 = arith.constant 0 : index
      %c0_14 = arith.constant 0 : index
      %15 = vector.load %arg7[%c0_13, %c0_14] : memref<16x128xf32, #tpu.memory_space<vmem>>, vector<16x128xf32>
      tpu.vector_store %arg7[%c0_13, %c0_14], %14 {strides = array<i32>} : memref<16x128xf32, #tpu.memory_space<vmem>>, vector<16x128xf32>,
    } else {
    }
    %c0 = arith.constant 0 : index
    %c0_1 = arith.constant 0 : index
    %3 = vector.load %arg7[%c0, %c0_1] : memref<16x128xf32, #tpu.memory_space<vmem>>, vector<16x128xf32>
    %c0_2 = arith.constant 0 : index
    %c0_3 = arith.constant 0 : index
    %c0_4 = arith.constant 0 : index
    %4 = vector.load %arg4[%c0_2, %c0_3, %c0_4] : memref<1x16x128xf32, #tpu.memory_space<vmem>>, vector<1x16x128xf32>
    %5 = vector.shape_cast %4 : vector<1x16x128xf32> to vector<16x128xf32>
    %c0_5 = arith.constant 0 : index
    %c0_6 = arith.constant 0 : index
    %c0_7 = arith.constant 0 : index
    %6 = vector.load %arg5[%c0_5, %c0_6, %c0_7] : memref<1x128x128xf32, #tpu.memory_space<vmem>>, vector<1x128x128xf32>
    %7 = vector.shape_cast %6 : vector<1x128x128xf32> to vector<128x128xf32>
    %cst = arith.constant dense<0.000000e+00> : vector<16x128xf32>
    %8 = tpu.matmul %5, %7, %cst {dimension_numbers = #tpu.dot_dimension_numbers<[1], [0], [0], [1], [0, 0, 1, 1], [], []>} : vector<16x128xf32>, vector<128x128xf32>, vector<16x128xf32> -> vector<16x128xf32>
    %9 = arith.addf %3, %8 : vector<16x128xf32>
    %c0_8 = arith.constant 0 : index
    %c0_9 = arith.constant 0 : index
    %10 = vector.load %arg7[%c0_8, %c0_9] : memref<16x128xf32, #tpu.memory_space<vmem>>, vector<16x128xf32>
    tpu.vector_store %arg7[%c0_8, %c0_9], %9 {strides = array<i32>} : memref<16x128xf32, #tpu.memory_space<vmem>>, vector<16x128xf32>,
    %c0_i32_10 = arith.constant 0 : i32
    %11 = arith.cmpi eq, %arg3, %c0_i32_10 : i32
    %12 = arith.extui %11 : i1 to i32
    %c0_i32_11 = arith.constant 0 : i32
    %13 = arith.cmpi ne, %12, %c0_i32_11 : i32
    scf.if %13 {
      %c0_12 = arith.constant 0 : index
      %c0_13 = arith.constant 0 : index
      %14 = vector.load %arg7[%c0_12, %c0_13] : memref<16x128xf32, #tpu.memory_space<vmem>>, vector<16x128xf32>
      %c0_14 = arith.constant 0 : index
      %c0_15 = arith.constant 0 : index
      %c0_16 = arith.constant 0 : index
      %15 = vector.load %arg6[%c0_14, %c0_15, %c0_16] : memref<1x16x128xf32, #tpu.memory_space<vmem>>, vector<1x16x128xf32>
      %16 = vector.shape_cast %15 : vector<1x16x128xf32> to vector<16x128xf32>
      %17 = vector.shape_cast %14 : vector<16x128xf32> to vector<1x16x128xf32>
      tpu.vector_store %arg6[%c0_14, %c0_15, %c0_16], %17 {strides = array<i32>} : memref<1x16x128xf32, #tpu.memory_space<vmem>>, vector<1x16x128xf32>,
    } else {
    }
    return
  }
  func.func @transform_0(%arg0: i32, %arg1: i32, %arg2: i32, %arg3: i32) -> (i32, i32, i32) {
    %c0_i32 = arith.constant 0 : i32
    return %arg0, %arg1, %arg3 : i32, i32, i32
  }
  func.func @transform_1(%arg0: i32, %arg1: i32, %arg2: i32, %arg3: i32) -> (i32, i32, i32) {
    %c0_i32 = arith.constant 0 : i32
    return %arg0, %arg3, %arg2 : i32, i32, i32
  }
  func.func @transform_2(%arg0: i32, %arg1: i32, %arg2: i32, %arg3: i32) -> (i32, i32, i32) {
    %c0_i32 = arith.constant 0 : i32
    return %arg0, %arg1, %arg2 : i32, i32, i32
  }
}

</mosaic_0001>

<llo_original>
// kernel: tpu_custom_call.1
$region0: #{tpu_custom_call.1}
  #allocation0 [shape = 'u32[]', space=smem, size = 0x4, offset = 0x4, fixed_abs, tag = 'smem constant byte address 0x4 - core index']
  #allocation1 [shape = 'u32[72,128]{1,0:T(1,128)}', space=vmem, size = 0x9000, scoped, tag = 'internal scratch']
  #allocation2 [shape = 'f32[16,128]{1,0:T(8,128)}', space=vmem, size = 0x2000, scoped, tag = 'scratch operand']
  %s0 = inlined_call_operand.hbm [shape: f32[3,16,128], index: 0, kind: input, shape index: {}]
  %s1 = inlined_call_operand.hbm [shape: f32[3,128,128], index: 1, kind: input, shape index: {}]
  %s2 = inlined_call_operand.hbm [shape: f32[3,16,128], index: 2, kind: output, shape index: {}]
  %s3 = sld [smem:[#allocation0]]
  $region57: #{tpu_custom_call.1} parent=0
    _
  %s5 = ssub.s32 1, %s3
  %s6 = scalar_select 0, %s5, %s3
  $region1: #{tpu_custom_call.1} parent=0
    #allocation3 [shape = 'u8[16384]{0}', space=vmem, size = 0x4000, scoped, tag = 'input window, operand 0']
    #allocation4 [shape = 's32[2]{0}', space=sflag, size = 0x8, scoped, tag = 'scoped memory for tpu_custom_call.1']
    #allocation5 [shape = 's32[2]{0}', space=sflag, size = 0x8, scoped, tag = 'scoped memory for tpu_custom_call.1']
    #allocation6 [shape = 'u8[131072]{0}', space=vmem, size = 0x20000, scoped, tag = 'input window, operand 1']
    #allocation7 [shape = 's32[2]{0}', space=sflag, size = 0x8, scoped, tag = 'scoped memory for tpu_custom_call.1']
    #allocation8 [shape = 'u8[16384]{0}', space=vmem, size = 0x4000, scoped, tag = 'output window, operand 0']
    %7 = vsyncpa [#allocation4], 0
    %s8 = scalar_lea.sflag [#allocation4], 1
    %9 = vsyncpa %s8, 0
    %10 = vsyncpa [#allocation7], 0
    %s11 = scalar_lea.sflag [#allocation7], 1
    %12 = vsyncpa %s11, 0
    %13 = vsyncpa [#allocation5], 0
    %s14 = scalar_lea.sflag [#allocation5], 1
    %15 = vsyncpa %s14, 0
    loop: start=0, step=1, limit=5
    $region2: #{tpu_custom_call.1} parent=1 // loop_pre_header
      _
    $region3: #{tpu_custom_call.1} parent=1 // loop_header
      %s17 = sphi 0, %s21
      %p18 = scmp.ge.s32.totalorder %s17, 5
      %s24 = sphi 0, %s50
      %s25 = sphi 0, %s46
      %s26 = sphi 0, %s42
      %s27 = sphi 0, %s38
      %s28 = sphi 0, %s24
      %s29 = sphi 0, %s25
      %s30 = sphi 0, %s26
      %s31 = sphi 0, %s27
      %s32 = sphi 0, %s28
      %s33 = sphi 0, %s29
      %s34 = sphi 0, %s30
      %s35 = sphi 0, %s31
      %s57 = sphi 0, %s59
      %s60 = sphi 0, %s57
      %s61 = sphi 0, %s60
      %s77 = sphi 0, %s61
      %s87 = sphi 0, %s89
      %s90 = sphi 0, %s87
      %s91 = sphi 0, %s90
      %s107 = sphi 0, %s91
      %s117 = sphi 0, %s119
      %s120 = sphi 0, %s117
      %s121 = sphi 0, %s120
      %s137 = sphi 0, %s121
    $region4: #{tpu_custom_call.1} parent=1 // loop_header_branch
      %20 = sbr.rel (%p18) target = $region8
    $region5: #{tpu_custom_call.1} parent=1 // loop_body
      %s22 = ssub.s32 %s17, 1
      %s23 = ssub.s32 %s17, 2
      %s36 = sadd.s32 1, %s27
      %p37 = scmp.ge.s32.totalorder %s36, 1
      %s38 = scalar_select %p37, 0, %s36
      %s39 = sadd.s32 1, %s26
      %s40 = scalar_select %p37, %s39, %s26
      %p41 = scmp.ge.s32.totalorder %s40, 1
      %s42 = scalar_select %p41, 0, %s40
      %s43 = sadd.s32 1, %s25
      %s44 = scalar_select %p41, %s43, %s25
      %p45 = scmp.ge.s32.totalorder %s44, 1
      %s46 = scalar_select %p45, 0, %s44
      %s47 = sadd.s32 1, %s24
      %s48 = scalar_select %p45, %s47, %s24
      %p49 = scmp.ge.s32.totalorder %s48, 3
      %s50 = scalar_select %p49, 0, %s48
      %s51 = ssub.s32 %s24, %s50
      %s52 = ssub.s32 %s25, %s46
      %s53 = sor.u32 %s51, %s52
      %s54 = ssub.s32 %s27, %s38
      %s55 = sor.u32 %s53, %s54
      %p56 = scmp.eq.s32.totalorder %s55, 0
      %s58 = sadd.s32 %s57, 1
      %s59 = scalar_select %p56, %s57, %s58
      %p62 = pneg %p56
      %p63 = scmp.eq.s32.totalorder %s17, 2
      %p64 = por %p62, %p63
      %p65 = scmp.ne.s32.totalorder %s57, %s60
      %p66 = scmp.eq.s32.totalorder %s17, 0
      %p67 = por %p65, %p66
      %p68 = scmp.ne.s32.totalorder %s57, %s60
      %p69 = scmp.eq.s32.totalorder %s22, 2
      %p70 = por %p68, %p69
      %p71 = scmp.ne.s32.totalorder %s60, %s61
      %p72 = scmp.eq.s32.totalorder %s22, 0
      %p73 = por %p71, %p72
      %p74 = scmp.ne.s32.totalorder %s60, %s61
      %p75 = scmp.eq.s32.totalorder %s23, 2
      %p76 = por %p74, %p75
      %p78 = scmp.ne.s32.totalorder %s61, %s77
      %p79 = scmp.eq.s32.totalorder %s23, 0
      %p80 = por %p78, %p79
      %s81 = ssub.s32 %s24, %s50
      %s82 = ssub.s32 %s27, %s38
      %s83 = sor.u32 %s81, %s82
      %s84 = ssub.s32 %s26, %s42
      %s85 = sor.u32 %s83, %s84
      %p86 = scmp.eq.s32.totalorder %s85, 0
      %s88 = sadd.s32 %s87, 1
      %s89 = scalar_select %p86, %s87, %s88
      %p92 = pneg %p86
      %p93 = scmp.eq.s32.totalorder %s17, 2
      %p94 = por %p92, %p93
      %p95 = scmp.ne.s32.totalorder %s87, %s90
      %p96 = scmp.eq.s32.totalorder %s17, 0
      %p97 = por %p95, %p96
      %p98 = scmp.ne.s32.totalorder %s87, %s90
      %p99 = scmp.eq.s32.totalorder %s22, 2
      %p100 = por %p98, %p99
      %p101 = scmp.ne.s32.totalorder %s90, %s91
      %p102 = scmp.eq.s32.totalorder %s22, 0
      %p103 = por %p101, %p102
      %p104 = scmp.ne.s32.totalorder %s90, %s91
      %p105 = scmp.eq.s32.totalorder %s23, 2
      %p106 = por %p104, %p105
      %p108 = scmp.ne.s32.totalorder %s91, %s107
      %p109 = scmp.eq.s32.totalorder %s23, 0
      %p110 = por %p108, %p109
      %s111 = ssub.s32 %s24, %s50
      %s112 = ssub.s32 %s25, %s46
      %s113 = sor.u32 %s111, %s112
      %s114 = ssub.s32 %s26, %s42
      %s115 = sor.u32 %s113, %s114
      %p116 = scmp.eq.s32.totalorder %s115, 0
      %s118 = sadd.s32 %s117, 1
      %s119 = scalar_select %p116, %s117, %s118
      %p122 = pneg %p116
      %p123 = scmp.eq.s32.totalorder %s17, 2
      %p124 = por %p122, %p123
      %p125 = scmp.ne.s32.totalorder %s117, %s120
      %p126 = scmp.eq.s32.totalorder %s17, 0
      %p127 = por %p125, %p126
      %p128 = scmp.ne.s32.totalorder %s117, %s120
      %p129 = scmp.eq.s32.totalorder %s22, 2
      %p130 = por %p128, %p129
      %p131 = scmp.ne.s32.totalorder %s120, %s121
      %p132 = scmp.eq.s32.totalorder %s22, 0
      %p133 = por %p131, %p132
      %p134 = scmp.ne.s32.totalorder %s120, %s121
      %p135 = scmp.eq.s32.totalorder %s23, 2
      %p136 = por %p134, %p135
      %p138 = scmp.ne.s32.totalorder %s121, %s137
      %p139 = scmp.eq.s32.totalorder %s23, 0
      %p140 = por %p138, %p139
      %p141 = scmp.le.s32.totalorder 1, %s17
      %p142 = scmp.lt.s32.totalorder %s17, 4
      %p143 = pnand %p141, %p142
      %p144 = pneg %p143
      // Predicated region
      $region9: #{tpu_custom_call.1} parent=5 // pred_check
        _
      $region10: #{tpu_custom_call.1} parent=5 // pred_check_branch
        %146 = sbr.rel (%p143) target = $region12
      $region11: #{tpu_custom_call.1} parent=5 // pred_region
        %s147 = ssub.s32 %s17, 1
      $region12: #{tpu_custom_call.1} parent=5 // pred_fallthru
        _
      %p148 = scmp.lt.s32.totalorder %s17, 3
      // Predicated region
      $region13: #{tpu_custom_call.1} parent=5 // pred_check
        %p149 = pneg %p148
      $region14: #{tpu_custom_call.1} parent=5 // pred_check_branch
        %151 = sbr.rel (%p149) target = $region16
      $region15: #{tpu_custom_call.1} parent=5 // pred_region
        // Predicated region
        $region17: #{tpu_custom_call.1} parent=15 // pred_check
          %p152 = pneg %p67
        $region18: #{tpu_custom_call.1} parent=15 // pred_check_branch
          %154 = sbr.rel (%p152) target = $region20
        $region19: #{tpu_custom_call.1} parent=15 // pred_region
          %s155 = sand.u32 %s57, 1
          %s156 = scalar_lea.sflag [#allocation4], %s155
          %s157 = sand.u32 %s57, 1
          %s158 = smul.addr %s157, 16
          %s159 = scalar_lea.vmem [#allocation3], %s158
          %s160 = smul.u32 2, %s25
          %162 = vsyncadd %s156, 0
          %s163 = sadd.s32 %s27, %s160
          %s164 = smul.addr %s24, 2
          %s165 = sadd.s32 %s163, %s164
          %s166 = smul.addr %s165, 8
          %s167 = scalar_lea.hbm %s0, %s166
          %s168 = sshll.u32 %s167, 4
          %s169 = int_to_ptr.hbm [resolvable:$true] %s168
          %s170 = sshll.u32 %s159, 4
          %s171 = int_to_ptr.vmem [resolvable:$true] %s170
          %176 = dma.hbm_to_vmem [thread:$0]  %s169, 256, %s171, %s156, 128, 128, 8
        $region20: #{tpu_custom_call.1} parent=15 // pred_fallthru
          _
        // Predicated region
        $region21: #{tpu_custom_call.1} parent=15 // pred_check
          %p177 = pneg %p97
        $region22: #{tpu_custom_call.1} parent=15 // pred_check_branch
          %179 = sbr.rel (%p177) target = $region24
        $region23: #{tpu_custom_call.1} parent=15 // pred_region
          %s180 = sand.u32 %s87, 1
          %s181 = scalar_lea.sflag [#allocation7], %s180
          %s182 = sand.u32 %s87, 1
          %s183 = smul.addr %s182, 128
          %s184 = scalar_lea.vmem [#allocation6], %s183
          %s185 = smul.u32 16, %s27
          %187 = vsyncadd %s181, 0
          %s188 = sadd.s32 %s26, %s185
          %s189 = smul.addr %s24, 16
          %s190 = sadd.s32 %s188, %s189
          %s191 = smul.addr %s190, 8
          %s192 = scalar_lea.hbm %s1, %s191
          %s193 = sshll.u32 %s192, 4
          %s194 = int_to_ptr.hbm [resolvable:$true] %s193
          %s195 = sshll.u32 %s184, 4
          %s196 = int_to_ptr.vmem [resolvable:$true] %s195
          %201 = dma.hbm_to_vmem [thread:$0]  %s194, 2048, %s196, %s181, 128, 128, 8
        $region24: #{tpu_custom_call.1} parent=15 // pred_fallthru
          _
      $region16: #{tpu_custom_call.1} parent=5 // pred_fallthru
        _
      %p202 = scmp.le.s32.totalorder 1, %s17
      %p203 = scmp.lt.s32.totalorder %s17, 4
      %p204 = pnand %p202, %p203
      %p205 = pneg %p204
      // Predicated region
      $region25: #{tpu_custom_call.1} parent=5 // pred_check
        _
      $region26: #{tpu_custom_call.1} parent=5 // pred_check_branch
        %207 = sbr.rel (%p204) target = $region28
      $region27: #{tpu_custom_call.1} parent=5 // pred_region
        %s208 = ssub.s32 %s17, 1
        %s209 = sand.u32 %s60, 1
        %s210 = scalar_lea.sflag [#allocation4], %s209
        %s211 = sand.u32 %s60, 1
        %s212 = smul.addr %s211, 16
        %s213 = scalar_lea.vmem [#allocation3], %s212
        // Predicated region
        $region29: #{tpu_custom_call.1} parent=27 // pred_check
          %p214 = pneg %p73
        $region30: #{tpu_custom_call.1} parent=27 // pred_check_branch
          %216 = sbr.rel (%p214) target = $region32
        $region31: #{tpu_custom_call.1} parent=27 // pred_region
          %218 = dma.done %s210, 256
        $region32: #{tpu_custom_call.1} parent=27 // pred_fallthru
          _
        %s219 = sand.u32 %s90, 1
        %s220 = scalar_lea.sflag [#allocation7], %s219
        %s221 = sand.u32 %s90, 1
        %s222 = smul.addr %s221, 128
        %s223 = scalar_lea.vmem [#allocation6], %s222
        // Predicated region
        $region33: #{tpu_custom_call.1} parent=27 // pred_check
          %p224 = pneg %p103
        $region34: #{tpu_custom_call.1} parent=27 // pred_check_branch
          %226 = sbr.rel (%p224) target = $region36
        $region35: #{tpu_custom_call.1} parent=27 // pred_region
          %228 = dma.done %s220, 2048
        $region36: #{tpu_custom_call.1} parent=27 // pred_fallthru
          _
        %s229 = sand.u32 %s60, 1
        %s230 = scalar_lea.sflag [#allocation4], %s229
        %s231 = sand.u32 %s60, 1
        %s232 = smul.addr %s231, 16
        %s233 = scalar_lea.vmem [#allocation3], %s232
        %p234 = pneg %p73
        %p235 = pneg %p70
        %s236 = sand.u32 %s90, 1
        %s237 = scalar_lea.sflag [#allocation7], %s236
        %s238 = sand.u32 %s90, 1
        %s239 = smul.addr %s238, 128
        %s240 = scalar_lea.vmem [#allocation6], %s239
        %p241 = pneg %p103
        %p242 = pneg %p100
        %p243 = pneg %p133
        %p244 = pneg %p130
        %s245 = sand.u32 %s120, 1
        %s246 = scalar_lea.sflag [#allocation5], %s245
        %s247 = sand.u32 %s120, 1
        %s248 = smul.addr %s247, 16
        %s249 = scalar_lea.vmem [#allocation8], %s248
        %s250 = smul.u32 2, %s29
        %s251 = smul.u32 16, %s31
        %s252 = smul.u32 2, %s29
        %p253 = scmp.eq.s32.totalorder %s31, 0
        // Predicated region
        $region37: #{tpu_custom_call.1} parent=27 // pred_check
          %p254 = pneg %p253
        $region38: #{tpu_custom_call.1} parent=27 // pred_check_branch
          %256 = sbr.rel (%p254) target = $region40
        $region39: #{tpu_custom_call.1} parent=27 // pred_region
          %257 = vst [vmem:[#allocation2] sm:$0xff] 0.0
          %258 = vst [vmem:[#allocation2 + $0x8] sm:$0xff] 0.0
        $region40: #{tpu_custom_call.1} parent=27 // pred_fallthru
          _
        %v259 = vld [vmem:[#allocation2] sm:$0xff]
        %v260 = vld [vmem:[#allocation2 + $0x8] sm:$0xff]
        %v261 = vld [vmem:[%s213] sm:$0xff]
        %v262 = vld [vmem:[%s213 + $0x8] sm:$0xff]
        %v263 = vld [vmem:[%s223] sm:$0xff]
        %v264 = vld [vmem:[%s223 + $0x8] sm:$0xff]
        %v265 = vld [vmem:[%s223 + $0x10] sm:$0xff]
        %v266 = vld [vmem:[%s223 + $0x18] sm:$0xff]
        %v267 = vld [vmem:[%s223 + $0x20] sm:$0xff]
        %v268 = vld [vmem:[%s223 + $0x28] sm:$0xff]
        %v269 = vld [vmem:[%s223 + $0x30] sm:$0xff]
        %v270 = vld [vmem:[%s223 + $0x38] sm:$0xff]
        %v271 = vld [vmem:[%s223 + $0x40] sm:$0xff]
        %v272 = vld [vmem:[%s223 + $0x48] sm:$0xff]
        %v273 = vld [vmem:[%s223 + $0x50] sm:$0xff]
        %v274 = vld [vmem:[%s223 + $0x58] sm:$0xff]
        %v275 = vld [vmem:[%s223 + $0x60] sm:$0xff]
        %v276 = vld [vmem:[%s223 + $0x68] sm:$0xff]
        %v277 = vld [vmem:[%s223 + $0x70] sm:$0xff]
        %v278 = vld [vmem:[%s223 + $0x78] sm:$0xff]
        %279 = vmatpush.msra.mxu0 %v278
        %280 = vmatpush.msra.mxu0 %v277
        %281 = vmatpush.msra.mxu0 %v276
        %282 = vmatpush.msra.mxu0 %v275
        %283 = vmatpush.msra.mxu0 %v274
        %284 = vmatpush.msra.mxu0 %v273
        %285 = vmatpush.msra.mxu0 %v272
        %286 = vmatpush.msra.mxu0 %v271
        %287 = vmatpush.msra.mxu0 %v270
        %288 = vmatpush.msra.mxu0 %v269
        %289 = vmatpush.msra.mxu0 %v268
        %290 = vmatpush.msra.mxu0 %v267
        %291 = vmatpush.msra.mxu0 %v266
        %292 = vmatpush.msra.mxu0 %v265
        %293 = vmatpush.msra.mxu0 %v264
        %294 = vmatpush.msra.mxu0 %v263
        %295 = vmatmul.f32.gmra.mxu0 %v261
        %v296 = vpop.f32.mrf.mxu0
        %v297 = vadd.f32 0.0, %v296
        %298 = vmatmul.f32.gmra.mxu0 %v262
        %v299 = vpop.f32.mrf.mxu0
        %v300 = vadd.f32 0.0, %v299
        %301 = vdwg.mxu0
        %v302 = vadd.f32 %v259, %v297
        %v303 = vadd.f32 %v260, %v300
        %304 = vst [vmem:[#allocation2] sm:$0xff] %v302
        %305 = vst [vmem:[#allocation2 + $0x8] sm:$0xff] %v303
        // Predicated region
        $region41: #{tpu_custom_call.1} parent=27 // pred_check
          %p306 = pneg %p253
        $region42: #{tpu_custom_call.1} parent=27 // pred_check_branch
          %308 = sbr.rel (%p306) target = $region44
        $region43: #{tpu_custom_call.1} parent=27 // pred_region
          %v309 = vld [vmem:[#allocation2] sm:$0xff]
          %v310 = vld [vmem:[#allocation2 + $0x8] sm:$0xff]
          %311 = vst [vmem:[%s249] sm:$0xff] %v309
          %312 = vst [vmem:[%s249 + $0x8] sm:$0xff] %v310
        $region44: #{tpu_custom_call.1} parent=27 // pred_fallthru
          _
        %s313 = sand.u32 %s120, 1
        %s314 = scalar_lea.sflag [#allocation5], %s313
        %s315 = sand.u32 %s120, 1
        %s316 = smul.addr %s315, 16
        %s317 = scalar_lea.vmem [#allocation8], %s316
        // Predicated region
        $region45: #{tpu_custom_call.1} parent=27 // pred_check
          %p318 = pneg %p130
        $region46: #{tpu_custom_call.1} parent=27 // pred_check_branch
          %320 = sbr.rel (%p318) target = $region48
        $region47: #{tpu_custom_call.1} parent=27 // pred_region
          %s321 = smul.u32 2, %s29
          %323 = vsyncadd %s314, 0
          %s324 = sadd.s32 %s30, %s321
          %s325 = smul.addr %s28, 2
          %s326 = sadd.s32 %s324, %s325
          %s327 = smul.addr %s326, 8
          %s328 = scalar_lea.hbm %s2, %s327
          %s329 = sshll.u32 %s317, 4
          %s330 = int_to_ptr.vmem [resolvable:$true] %s329
          %s331 = sshll.u32 %s328, 4
          %s332 = int_to_ptr.hbm [resolvable:$true] %s331
          %337 = dma.vmem_to_hbm [thread:$0]  %s330, 256, %s332, %s314, 128, 128, 8
        $region48: #{tpu_custom_call.1} parent=27 // pred_fallthru
          _
      $region28: #{tpu_custom_call.1} parent=5 // pred_fallthru
        _
      %p338 = scmp.le.s32.totalorder 2, %s17
      // Predicated region
      $region49: #{tpu_custom_call.1} parent=5 // pred_check
        %p339 = pneg %p338
      $region50: #{tpu_custom_call.1} parent=5 // pred_check_branch
        %341 = sbr.rel (%p339) target = $region52
      $region51: #{tpu_custom_call.1} parent=5 // pred_region
        %s342 = ssub.s32 %s17, 2
        // Predicated region
        $region53: #{tpu_custom_call.1} parent=51 // pred_check
          %p343 = pneg %p136
        $region54: #{tpu_custom_call.1} parent=51 // pred_check_branch
          %345 = sbr.rel (%p343) target = $region56
        $region55: #{tpu_custom_call.1} parent=51 // pred_region
          %s346 = sand.u32 %s121, 1
          %s347 = scalar_lea.sflag [#allocation5], %s346
          %s348 = sand.u32 %s121, 1
          %s349 = smul.addr %s348, 16
          %s350 = scalar_lea.vmem [#allocation8], %s349
          %352 = dma.done %s347, 256
        $region56: #{tpu_custom_call.1} parent=51 // pred_fallthru
          _
      $region52: #{tpu_custom_call.1} parent=5 // pred_fallthru
        _
    $region6: #{tpu_custom_call.1} parent=1 // loop_footer
      %s21 = sadd.s32 1, %s17
    $region7: #{tpu_custom_call.1} parent=1 // loop_footer_branch
      %16 = sbr.rel target = $region3
    $region8: #{tpu_custom_call.1} parent=1 // loop_exit
      _
    %353 = vsyncpa [#allocation4], 1
    %s354 = scalar_lea.sflag [#allocation4], 1
    %355 = vsyncpa %s354, 1
    %356 = vsyncpa [#allocation7], 1
    %s357 = scalar_lea.sflag [#allocation7], 1
    %358 = vsyncpa %s357, 1
    %359 = vsyncpa [#allocation5], 1
    %s360 = scalar_lea.sflag [#allocation5], 1
    %361 = vsyncpa %s360, 1

</llo_original>
